<compile_context>
chip_gen: v6e
topology: v6e:2x2x1
jax: 0.10.0
libtpu: 0.0.40
codegen_flags: <defaults>
</compile_context>

<pallas_src>
import jax
import jax.numpy as jnp
from jax import lax
from jax.experimental import pallas as pl
from jax.experimental.pallas import tpu as pltpu

VOCAB = 6          # nn.Embedding(6, inputDim)
S = 4              # number of embedding slots used by forward()
LANE = 128


def _round_up(x, m):
    return (x + m - 1) // m * m


def _cdiv(a, b):
    return (a + b - 1) // b


def eggs_kernel(idx_ref, ages_ref, t_attn_ref, attn_b_ref,
                table_ref, fc1_w_ref, fc1_b_ref, fc2_w_ref, fc2_b_ref,
                out_ref):
    # Per-block layouts (batch in the LANE dimension for the width-6 stage):
    #   idx    (S, TB) int32           ages   (2, TB) f32  [femaleAge; maleAge]
    #   t_attn (6, 1)  f32 = table @ attn_w   (precomputed once in the wrapper)
    #   attn_b (1,)    f32 in SMEM
    #   table  (6, Dp) mxu dtype, pre-scaled by 1/S (folds mean(dim=-2))
    #   fc1_w  (Dp, Op) / fc1_b (1, Op) / fc2_w (Op, Op) / fc2_b (1, Op)
    #   out    (TB, Op) f32
    # Weight blocks use a constant block index -> VMEM-resident across the grid.
    n_slots, TB = idx_ref.shape
    t_attn = t_attn_ref[...]                                  # (6, 1) f32
    attn_b = attn_b_ref[0]                                    # scalar from SMEM
    iota_v = lax.broadcasted_iota(jnp.int32, (VOCAB, TB), 0)

    # Fused width-6, batch-in-lanes pipeline: embedding lookup, age scaling,
    # attention logits, tanh score, score-weighted sum over the 4 slots.
    #   w6[v, b] = sum_s onehot_s[v, b] * scale_s[b] * tanh(logit_s[b])
    # NOTE: out-of-range indices give an all-zero one-hot row instead of
    # raising like nn.Embedding (documented semantic difference).
    w6 = jnp.zeros((VOCAB, TB), jnp.float32)
    for s in range(n_slots):                                  # S = 4, unrolled
        onehot = (idx_ref[pl.ds(s, 1), :] == iota_v).astype(jnp.float32)  # (6, TB)
        if s < 2:                                             # slot 0: female, slot 1: male
            scaled = onehot * ages_ref[pl.ds(s, 1), :]
        else:
            scaled = onehot
        logit = jnp.sum(scaled * t_attn, axis=0, keepdims=True) + attn_b  # (1, TB)
        w6 = w6 + scaled * jnp.tanh(logit)

    # pooled[b, d] = sum_v w6[v, b] * table[v, d]; contract dim 0 of both
    # operands so no explicit transpose is needed (table carries the 1/S).
    mxu_dtype = table_ref.dtype
    pooled = lax.dot_general(
        w6.astype(mxu_dtype), table_ref[...],
        dimension_numbers=(((0,), (0,)), ((), ())),
        preferred_element_type=jnp.float32)                   # (TB, Dp) f32

    # fc1 -> relu -> fc2: lane-dense 128-padded MXU matmuls, f32 accumulation.
    h = jnp.dot(pooled.astype(mxu_dtype), fc1_w_ref[...],
                preferred_element_type=jnp.float32) + fc1_b_ref[...]
    h = jnp.maximum(h, 0.0)
    out = jnp.dot(h.astype(mxu_dtype), fc2_w_ref[...],
                  preferred_element_type=jnp.float32) + fc2_b_ref[...]
    out_ref[...] = out.astype(out_ref.dtype)
    # TODO(synk): nn.Dropout(0.5) is defined in __init__ but never used in forward; omitted.


def prepare_params(params, *, mxu_dtype=jnp.float32):
    """Pad / fold parameters ONCE (hoisted out of the per-call wrapper).

    mxu_dtype controls only the three matmul weight operands (bf16 recommended
    on v6e/v7x: half the resident VMEM / weight DMA and a much higher MXU
    rate).  Biases, t_attn and all in-kernel VPU/EUP math stay f32 (v5e-safe).
    """
    f32 = jnp.float32
    D = params['table'].shape[1]
    O = params['fc1_w'].shape[1]
    Dp, Op = _round_up(D, LANE), _round_up(O, LANE)

    table = params['table'].astype(f32)                                   # (6, D)
    # attentionFc folded to width 6 (grid-invariant -> computed here once).
    t_attn = (table @ params['attn_w'].astype(f32)).reshape(VOCAB, 1)
    # mean over the 4 slots folded into the pooling matmul weights.
    table_p = jnp.zeros((VOCAB, Dp), mxu_dtype).at[:, :D].set(
        (table * (1.0 / S)).astype(mxu_dtype))
    fc1_w = jnp.zeros((Dp, Op), mxu_dtype).at[:D, :O].set(
        params['fc1_w'].astype(mxu_dtype))
    fc2_w = jnp.zeros((Op, Op), mxu_dtype).at[:O, :O].set(
        params['fc2_w'].astype(mxu_dtype))
    fc1_b = jnp.zeros((1, Op), f32).at[:, :O].set(
        params['fc1_b'].reshape(1, O).astype(f32))
    fc2_b = jnp.zeros((1, Op), f32).at[:, :O].set(
        params['fc2_b'].reshape(1, O).astype(f32))
    attn_b = params['attn_b'].reshape(1).astype(f32)
    return dict(t_attn=t_attn, attn_b=attn_b, table_p=table_p,
                fc1_w=fc1_w, fc1_b=fc1_b, fc2_w=fc2_w, fc2_b=fc2_b,
                D=D, O=O, Dp=Dp, Op=Op)


def _choose_tiling(B, block_b):
    """Pick (TB, n_tiles) for the 1-D batch grid.

    The batch sits in the lane dimension, so multi-tile TB must be a multiple
    of 128 (lane-dense blocks); a single tile may be any multiple of 8 (block
    dim == full array dim).  Aim for >= 2 tiles when the batch can feed both
    v7x TensorCores, with padding bounded well below a full extra tile
    (no 2x blow-up for B slightly above block_b).
    """
    if B < 2 * LANE:
        return _round_up(B, 8), 1
    block_b = max(LANE, (block_b // LANE) * LANE)
    n_min = max(_cdiv(B, block_b), 2)
    best_tb, best_n = None, None
    for n in range(n_min, n_min + 8):           # tiny search: minimize padded rows
        tb = _round_up(_cdiv(B, n), LANE)
        if best_tb is None or n * tb < best_n * best_tb:
            best_tb, best_n = tb, n
    return best_tb, best_n


def eggs_data_net(index, female_age, male_age, prepared, *, block_b=512):
    """index: (B, 4) int, female_age/male_age: (B,) -> (B, outputDim) f32.

    `prepared` is the padded/folded parameter pytree from prepare_params(),
    built once and reused across calls.
    """
    B, n_slots = index.shape
    assert n_slots == S
    Dp, Op, O = prepared['Dp'], prepared['Op'], prepared['O']
    TB, n_tiles = _choose_tiling(B, block_b)
    Bp = TB * n_tiles

    f32 = jnp.float32
    # Batch-in-lanes inputs: idx (S, Bp) int32, ages (2, Bp) f32 (packed
    # [femaleAge; maleAge]) -> lane-dense blocks instead of (TB*S, 1) columns.
    idx = jnp.zeros((S, Bp), jnp.int32).at[:, :B].set(index.astype(jnp.int32).T)
    ages = jnp.zeros((2, Bp), f32)
    ages = ages.at[0, :B].set(female_age.astype(f32))
    ages = ages.at[1, :B].set(male_age.astype(f32))

    def _nbytes(x):
        return int(x.size) * x.dtype.itemsize

    weight_bytes = sum(_nbytes(prepared[k]) for k in
                       ('t_attn', 'attn_b', 'table_p', 'fc1_w', 'fc1_b',
                        'fc2_w', 'fc2_b'))
    cost = pl.CostEstimate(
        flops=2 * Bp * (S * VOCAB + VOCAB * Dp + Dp * Op + Op * Op),
        transcendentals=Bp * S,
        bytes_accessed=_nbytes(idx) + _nbytes(ages) + Bp * Op * 4 + weight_bytes)

    batch_lane = lambda rows: pl.BlockSpec((rows, TB), lambda i: (0, i))
    # Constant block index -> weights stay VMEM-resident across the batch grid.
    # (pl.Buffered(1) on these specs would halve their VMEM; left at the
    # default double-buffering since the footprint is far below even the
    # v7x 64 MiB/TC budget at these sizes.)
    resident = lambda shape: pl.BlockSpec(shape, lambda i: (0, 0))

    out = pl.pallas_call(
        eggs_kernel,
        out_shape=jax.ShapeDtypeStruct((Bp, Op), f32),
        grid=(n_tiles,),
        in_specs=[
            batch_lane(S),                                        # idx (S, TB)
            batch_lane(2),                                        # ages (2, TB)
            resident((VOCAB, 1)),                                 # t_attn
            pl.BlockSpec(memory_space=pltpu.MemorySpace.SMEM),    # attn_b scalar
            resident((VOCAB, Dp)),                                # pooling table (1/S folded)
            resident((Dp, Op)),                                   # fc1 weight
            resident((1, Op)),                                    # fc1 bias
            resident((Op, Op)),                                   # fc2 weight
            resident((1, Op)),                                    # fc2 bias
        ],
        out_specs=pl.BlockSpec((TB, Op), lambda i: (i, 0)),       # lane-dense store
        compiler_params=pltpu.CompilerParams(
            dimension_semantics=("parallel",),     # shard batch tiles across TCs (v7x)
            vmem_limit_bytes=32 * 1024 * 1024),    # explicit budget, safe on 64 MiB v7x
        cost_estimate=cost,
    )(idx, ages, prepared['t_attn'], prepared['attn_b'], prepared['table_p'],
      prepared['fc1_w'], prepared['fc1_b'], prepared['fc2_w'], prepared['fc2_b'])

    # Consumers that tolerate the (Bp, Op) padding can take `out` directly and
    # skip this slice (it costs one extra HBM round trip on the padded array).
    return out[:B, :O]


def init_params(key, input_dim, output_dim):
    ks = jax.random.split(key, 7)

    def linear(kw, kb, fan_in, fan_out):
        bound = 1.0 / jnp.sqrt(jnp.float32(fan_in))
        w = jax.random.uniform(kw, (fan_in, fan_out), jnp.float32, -bound, bound)
        b = jax.random.uniform(kb, (1, fan_out), jnp.float32, -bound, bound)
        return w, b

    table = jax.random.normal(ks[0], (VOCAB, input_dim), jnp.float32)  # Embedding ~ N(0,1)
    fc1_w, fc1_b = linear(ks[1], ks[2], input_dim, output_dim)
    fc2_w, fc2_b = linear(ks[3], ks[4], output_dim, output_dim)
    attn_w, attn_b = linear(ks[5], ks[6], input_dim, 1)
    return dict(table=table, fc1_w=fc1_w, fc1_b=fc1_b,
                fc2_w=fc2_w, fc2_b=fc2_b, attn_w=attn_w, attn_b=attn_b)


if __name__ == "__main__":
    key = jax.random.PRNGKey(0)
    D_in, D_out = 32, 32
    params = init_params(jax.random.fold_in(key, 0), D_in, D_out)

    def reference(index, female_age, male_age):
        emb = params['table'][index]                              # (B, 4, D)
        emb = emb.at[:, 0, :].multiply(female_age[:, None])
        emb = emb.at[:, 1, :].multiply(male_age[:, None])
        scores = jnp.tanh(jnp.einsum('bsd,dk->bsk', emb, params['attn_w'])
                          + params['attn_b'])
        pooled = (emb * scores).mean(axis=1)
        h = jnp.maximum(pooled @ params['fc1_w'] + params['fc1_b'], 0.0)
        return h @ params['fc2_w'] + params['fc2_b']

    prepared_f32 = prepare_params(params)                             # exact / v5e-safe path
    prepared_bf16 = prepare_params(params, mxu_dtype=jnp.bfloat16)    # v6e/v7x MXU path

    def run_case(B, block_b, prepared, tol, tag):
        kb = jax.random.fold_in(key, B + 1)
        ka, kf, km = jax.random.split(kb, 3)
        index = jax.random.randint(ka, (B, S), 0, VOCAB, dtype=jnp.int32)
        female_age = jax.random.uniform(kf, (B,), jnp.float32, 0.5, 3.0)
        male_age = jax.random.uniform(km, (B,), jnp.float32, 0.5, 3.0)
        out = jax.block_until_ready(
            eggs_data_net(index, female_age, male_age, prepared, block_b=block_b))
        ref = reference(index, female_age, male_age)
        assert out.shape == (B, D_out), (tag, out.shape)
        err = float(jnp.max(jnp.abs(out - ref)))
        assert err <= tol, f"{tag}: max abs err = {err} > {tol}"

    # Single tile (TB == Bp == 16): batch deliberately not a multiple of 8.
    run_case(13, 512, prepared_f32, 2e-5, "f32/single-tile")
    # Multi-tile path: grid=(3,), TB=128, Bp=384 (bounded padding, megacore).
    run_case(300, 128, prepared_f32, 2e-5, "f32/multi-tile")
    # bf16 MXU operands (v6e/v7x recommendation) -> loosened tolerance.
    run_case(300, 128, prepared_bf16, 1e-1, "bf16/multi-tile")

    print("KERNEL_OK")
</pallas_src>

<mosaic_0001>
module attributes {stable_mosaic.version = 11 : i64} {
  func.func @eggs_kernel(%arg0: i32, %arg1: memref<4x16xi32, #tpu.memory_space<vmem>>, %arg2: memref<2x16xf32, #tpu.memory_space<vmem>>, %arg3: memref<6x1xf32, #tpu.memory_space<vmem>>, %arg4: memref<1xf32, #tpu.memory_space<smem>>, %arg5: memref<6x128xf32, #tpu.memory_space<vmem>>, %arg6: memref<128x128xf32, #tpu.memory_space<vmem>>, %arg7: memref<1x128xf32, #tpu.memory_space<vmem>>, %arg8: memref<128x128xf32, #tpu.memory_space<vmem>>, %arg9: memref<1x128xf32, #tpu.memory_space<vmem>>, %arg10: memref<16x128xf32, #tpu.memory_space<vmem>>) attributes {dimension_semantics = [#tpu.dimension_semantics<parallel>], iteration_bounds = array<i64: 1>, scalar_prefetch = 0 : i64, scratch_operands = 0 : i64, tpu.core_type = #tpu.core_type<tc>, window_params = [{transform_indices = @transform_0, window_bounds = array<i64: 4, 16>}, {transform_indices = @transform_1, window_bounds = array<i64: 2, 16>}, {pipeline_mode = #tpu.pipeline_mode<synchronous>, transform_indices = @transform_2, window_bounds = array<i64: 6, 1>}, {transform_indices = @transform_3, window_bounds = array<i64: 1>}, {pipeline_mode = #tpu.pipeline_mode<synchronous>, transform_indices = @transform_4, window_bounds = array<i64: 6, 128>}, {pipeline_mode = #tpu.pipeline_mode<synchronous>, transform_indices = @transform_5, window_bounds = array<i64: 128, 128>}, {pipeline_mode = #tpu.pipeline_mode<synchronous>, transform_indices = @transform_6, window_bounds = array<i64: 1, 128>}, {pipeline_mode = #tpu.pipeline_mode<synchronous>, transform_indices = @transform_7, window_bounds = array<i64: 128, 128>}, {pipeline_mode = #tpu.pipeline_mode<synchronous>, transform_indices = @transform_8, window_bounds = array<i64: 1, 128>}, {transform_indices = @transform_9, window_bounds = array<i64: 16, 128>}]} {
    %c0 = arith.constant 0 : index
    %c0_0 = arith.constant 0 : index
    %0 = vector.load %arg3[%c0, %c0_0] : memref<6x1xf32, #tpu.memory_space<vmem>>, vector<6x1xf32>
    %c0_1 = arith.constant 0 : index
    %1 = memref.load %arg4[%c0_1] : memref<1xf32, #tpu.memory_space<smem>>
    %2 = tpu.iota {dimensions = array<i32: 0>} : vector<6x16xi32>
    %cst = arith.constant 0.000000e+00 : f32
    %3 = vector.broadcast %cst : f32 to vector<6x16xf32>
    %c0_2 = arith.constant 0 : index
    %c0_3 = arith.constant 0 : index
    %4 = vector.load %arg1[%c0_2, %c0_3] : memref<4x16xi32, #tpu.memory_space<vmem>>, vector<1x16xi32>
    %5 = vector.broadcast %4 : vector<1x16xi32> to vector<6x16xi32>
    %6 = arith.cmpi eq, %5, %2 : vector<6x16xi32>
    %7 = arith.extui %6 : vector<6x16xi1> to vector<6x16xi32>
    %8 = arith.sitofp %7 : vector<6x16xi32> to vector<6x16xf32>
    %c0_4 = arith.constant 0 : index
    %c0_5 = arith.constant 0 : index
    %9 = vector.load %arg2[%c0_4, %c0_5] : memref<2x16xf32, #tpu.memory_space<vmem>>, vector<1x16xf32>
    %10 = vector.broadcast %9 : vector<1x16xf32> to vector<6x16xf32>
    %11 = arith.mulf %8, %10 : vector<6x16xf32>
    %12 = vector.broadcast %0 : vector<6x1xf32> to vector<6x16xf32>
    %13 = arith.mulf %11, %12 : vector<6x16xf32>
    %cst_6 = arith.constant dense<0.000000e+00> : vector<16xf32>
    %14 = vector.multi_reduction <add>, %13, %cst_6 [0] : vector<6x16xf32> to vector<16xf32>
    %15 = vector.shape_cast %14 : vector<16xf32> to vector<1x16xf32>
    %16 = vector.broadcast %1 : f32 to vector<1x16xf32>
    %17 = arith.addf %15, %16 : vector<1x16xf32>
    %18 = math.tanh %17 : vector<1x16xf32>
    %19 = vector.broadcast %18 : vector<1x16xf32> to vector<6x16xf32>
    %20 = arith.mulf %11, %19 : vector<6x16xf32>
    %21 = arith.addf %3, %20 : vector<6x16xf32>
    %c1 = arith.constant 1 : index
    %c0_7 = arith.constant 0 : index
    %22 = vector.load %arg1[%c1, %c0_7] : memref<4x16xi32, #tpu.memory_space<vmem>>, vector<1x16xi32>
    %23 = vector.broadcast %22 : vector<1x16xi32> to vector<6x16xi32>
    %24 = arith.cmpi eq, %23, %2 : vector<6x16xi32>
    %25 = arith.extui %24 : vector<6x16xi1> to vector<6x16xi32>
    %26 = arith.sitofp %25 : vector<6x16xi32> to vector<6x16xf32>
    %c1_8 = arith.constant 1 : index
    %c0_9 = arith.constant 0 : index
    %27 = vector.load %arg2[%c1_8, %c0_9] : memref<2x16xf32, #tpu.memory_space<vmem>>, vector<1x16xf32>
    %28 = vector.broadcast %27 : vector<1x16xf32> to vector<6x16xf32>
    %29 = arith.mulf %26, %28 : vector<6x16xf32>
    %30 = vector.broadcast %0 : vector<6x1xf32> to vector<6x16xf32>
    %31 = arith.mulf %29, %30 : vector<6x16xf32>
    %cst_10 = arith.constant dense<0.000000e+00> : vector<16xf32>
    %32 = vector.multi_reduction <add>, %31, %cst_10 [0] : vector<6x16xf32> to vector<16xf32>
    %33 = vector.shape_cast %32 : vector<16xf32> to vector<1x16xf32>
    %34 = vector.broadcast %1 : f32 to vector<1x16xf32>
    %35 = arith.addf %33, %34 : vector<1x16xf32>
    %36 = math.tanh %35 : vector<1x16xf32>
    %37 = vector.broadcast %36 : vector<1x16xf32> to vector<6x16xf32>
    %38 = arith.mulf %29, %37 : vector<6x16xf32>
    %39 = arith.addf %21, %38 : vector<6x16xf32>
    %c2 = arith.constant 2 : index
    %c0_11 = arith.constant 0 : index
    %40 = vector.load %arg1[%c2, %c0_11] : memref<4x16xi32, #tpu.memory_space<vmem>>, vector<1x16xi32>
    %41 = vector.broadcast %40 : vector<1x16xi32> to vector<6x16xi32>
    %42 = arith.cmpi eq, %41, %2 : vector<6x16xi32>
    %43 = arith.extui %42 : vector<6x16xi1> to vector<6x16xi32>
    %44 = arith.sitofp %43 : vector<6x16xi32> to vector<6x16xf32>
    %45 = vector.broadcast %0 : vector<6x1xf32> to vector<6x16xf32>
    %46 = arith.mulf %44, %45 : vector<6x16xf32>
    %cst_12 = arith.constant dense<0.000000e+00> : vector<16xf32>
    %47 = vector.multi_reduction <add>, %46, %cst_12 [0] : vector<6x16xf32> to vector<16xf32>
    %48 = vector.shape_cast %47 : vector<16xf32> to vector<1x16xf32>
    %49 = vector.broadcast %1 : f32 to vector<1x16xf32>
    %50 = arith.addf %48, %49 : vector<1x16xf32>
    %51 = math.tanh %50 : vector<1x16xf32>
    %52 = vector.broadcast %51 : vector<1x16xf32> to vector<6x16xf32>
    %53 = arith.mulf %44, %52 : vector<6x16xf32>
    %54 = arith.addf %39, %53 : vector<6x16xf32>
    %c3 = arith.constant 3 : index
    %c0_13 = arith.constant 0 : index
    %55 = vector.load %arg1[%c3, %c0_13] : memref<4x16xi32, #tpu.memory_space<vmem>>, vector<1x16xi32>
    %56 = vector.broadcast %55 : vector<1x16xi32> to vector<6x16xi32>
    %57 = arith.cmpi eq, %56, %2 : vector<6x16xi32>
    %58 = arith.extui %57 : vector<6x16xi1> to vector<6x16xi32>
    %59 = arith.sitofp %58 : vector<6x16xi32> to vector<6x16xf32>
    %60 = vector.broadcast %0 : vector<6x1xf32> to vector<6x16xf32>
    %61 = arith.mulf %59, %60 : vector<6x16xf32>
    %cst_14 = arith.constant dense<0.000000e+00> : vector<16xf32>
    %62 = vector.multi_reduction <add>, %61, %cst_14 [0] : vector<6x16xf32> to vector<16xf32>
    %63 = vector.shape_cast %62 : vector<16xf32> to vector<1x16xf32>
    %64 = vector.broadcast %1 : f32 to vector<1x16xf32>
    %65 = arith.addf %63, %64 : vector<1x16xf32>
    %66 = math.tanh %65 : vector<1x16xf32>
    %67 = vector.broadcast %66 : vector<1x16xf32> to vector<6x16xf32>
    %68 = arith.mulf %59, %67 : vector<6x16xf32>
    %69 = arith.addf %54, %68 : vector<6x16xf32>
    %c0_15 = arith.constant 0 : index
    %c0_16 = arith.constant 0 : index
    %70 = vector.load %arg5[%c0_15, %c0_16] : memref<6x128xf32, #tpu.memory_space<vmem>>, vector<6x128xf32>
    %cst_17 = arith.constant dense<0.000000e+00> : vector<16x128xf32>
    %71 = tpu.matmul %69, %70, %cst_17 {dimension_numbers = #tpu.dot_dimension_numbers<[0], [0], [1], [1], [0, 1, 1, 1], [], []>} : vector<6x16xf32>, vector<6x128xf32>, vector<16x128xf32> -> vector<16x128xf32>
    %c0_18 = arith.constant 0 : index
    %c0_19 = arith.constant 0 : index
    %72 = vector.load %arg6[%c0_18, %c0_19] : memref<128x128xf32, #tpu.memory_space<vmem>>, vector<128x128xf32>
    %cst_20 = arith.constant dense<0.000000e+00> : vector<16x128xf32>
    %73 = tpu.matmul %71, %72, %cst_20 {dimension_numbers = #tpu.dot_dimension_numbers<[1], [0], [0], [1], [0, 0, 1, 1], [], []>} : vector<16x128xf32>, vector<128x128xf32>, vector<16x128xf32> -> vector<16x128xf32>
    %c0_21 = arith.constant 0 : index
    %c0_22 = arith.constant 0 : index
    %74 = vector.load %arg7[%c0_21, %c0_22] : memref<1x128xf32, #tpu.memory_space<vmem>>, vector<1x128xf32>
    %75 = vector.broadcast %74 : vector<1x128xf32> to vector<16x128xf32>
    %76 = arith.addf %73, %75 : vector<16x128xf32>
    %cst_23 = arith.constant 0.000000e+00 : f32
    %77 = vector.broadcast %cst_23 : f32 to vector<16x128xf32>
    %78 = arith.maximumf %76, %77 : vector<16x128xf32>
    %c0_24 = arith.constant 0 : index
    %c0_25 = arith.constant 0 : index
    %79 = vector.load %arg8[%c0_24, %c0_25] : memref<128x128xf32, #tpu.memory_space<vmem>>, vector<128x128xf32>
    %cst_26 = arith.constant dense<0.000000e+00> : vector<16x128xf32>
    %80 = tpu.matmul %78, %79, %cst_26 {dimension_numbers = #tpu.dot_dimension_numbers<[1], [0], [0], [1], [0, 0, 1, 1], [], []>} : vector<16x128xf32>, vector<128x128xf32>, vector<16x128xf32> -> vector<16x128xf32>
    %c0_27 = arith.constant 0 : index
    %c0_28 = arith.constant 0 : index
    %81 = vector.load %arg9[%c0_27, %c0_28] : memref<1x128xf32, #tpu.memory_space<vmem>>, vector<1x128xf32>
    %82 = vector.broadcast %81 : vector<1x128xf32> to vector<16x128xf32>
    %83 = arith.addf %80, %82 : vector<16x128xf32>
    %c0_29 = arith.constant 0 : index
    %c0_30 = arith.constant 0 : index
    %84 = vector.load %arg10[%c0_29, %c0_30] : memref<16x128xf32, #tpu.memory_space<vmem>>, vector<16x128xf32>
    tpu.vector_store %arg10[%c0_29, %c0_30], %83 {strides = array<i32>} : memref<16x128xf32, #tpu.memory_space<vmem>>, vector<16x128xf32>,
    return
  }
  func.func @transform_0(%arg0: i32) -> (i32, i32) {
    %c0_i32 = arith.constant 0 : i32
    %c0_i32_0 = arith.constant 0 : i32
    return %c0_i32, %arg0 : i32, i32
  }
  func.func @transform_1(%arg0: i32) -> (i32, i32) {
    %c0_i32 = arith.constant 0 : i32
    %c0_i32_0 = arith.constant 0 : i32
    return %c0_i32, %arg0 : i32, i32
  }
  func.func @transform_2(%arg0: i32) -> (i32, i32) {
    %c0_i32 = arith.constant 0 : i32
    %c0_i32_0 = arith.constant 0 : i32
    %c0_i32_1 = arith.constant 0 : i32
    return %c0_i32, %c0_i32_0 : i32, i32
  }
  func.func @transform_3(%arg0: i32) -> i32 {
    %c0_i32 = arith.constant 0 : i32
    %c0_i32_0 = arith.constant 0 : i32
    return %c0_i32 : i32
  }
  func.func @transform_4(%arg0: i32) -> (i32, i32) {
    %c0_i32 = arith.constant 0 : i32
    %c0_i32_0 = arith.constant 0 : i32
    %c0_i32_1 = arith.constant 0 : i32
    return %c0_i32, %c0_i32_0 : i32, i32
  }
  func.func @transform_5(%arg0: i32) -> (i32, i32) {
    %c0_i32 = arith.constant 0 : i32
    %c0_i32_0 = arith.constant 0 : i32
    %c0_i32_1 = arith.constant 0 : i32
    return %c0_i32, %c0_i32_0 : i32, i32
  }
  func.func @transform_6(%arg0: i32) -> (i32, i32) {
    %c0_i32 = arith.constant 0 : i32
    %c0_i32_0 = arith.constant 0 : i32
    %c0_i32_1 = arith.constant 0 : i32
    return %c0_i32, %c0_i32_0 : i32, i32
  }
  func.func @transform_7(%arg0: i32) -> (i32, i32) {
    %c0_i32 = arith.constant 0 : i32
    %c0_i32_0 = arith.constant 0 : i32
    %c0_i32_1 = arith.constant 0 : i32
    return %c0_i32, %c0_i32_0 : i32, i32
  }
  func.func @transform_8(%arg0: i32) -> (i32, i32) {
    %c0_i32 = arith.constant 0 : i32
    %c0_i32_0 = arith.constant 0 : i32
    %c0_i32_1 = arith.constant 0 : i32
    return %c0_i32, %c0_i32_0 : i32, i32
  }
  func.func @transform_9(%arg0: i32) -> (i32, i32) {
    %c0_i32 = arith.constant 0 : i32
    %c0_i32_0 = arith.constant 0 : i32
    return %arg0, %c0_i32 : i32, i32
  }
}

</mosaic_0001>

<llo_original>
// kernel: tpu_custom_call.1
$region0: #{tpu_custom_call.1}
  #allocation0 [shape = 'u32[]', space=smem, size = 0x4, offset = 0x4, fixed_abs, tag = 'smem constant byte address 0x4 - core index']
  #allocation1 [shape = 'u32[144,128]{1,0:T(1,128)}', space=vmem, size = 0x12000, scoped, tag = 'internal scratch']
  #allocation2 [shape = 'f32[1]{0:T(128)S(6)}', space=smem, size = 0x200, scoped, tag = 'scoped memory for tpu_custom_call.1']
  %s0 = inlined_call_operand.vmem [shape: s32[4,16], index: 0, kind: input, shape index: {}]
  %s1 = inlined_call_operand.vmem [shape: f32[2,16], index: 1, kind: input, shape index: {}]
  %s2 = inlined_call_operand.vmem [shape: f32[6,1], index: 2, kind: input, shape index: {}]
  %s3 = inlined_call_operand.<no memory space> [shape: f32[1], index: 3, kind: input, shape index: {}]
  %s4 = inlined_call_operand.vmem [shape: f32[6,128], index: 4, kind: input, shape index: {}]
  %s5 = inlined_call_operand.hbm [shape: f32[128,128], index: 5, kind: input, shape index: {}]
  %s6 = inlined_call_operand.vmem [shape: f32[1,128], index: 6, kind: input, shape index: {}]
  %s7 = inlined_call_operand.hbm [shape: f32[128,128], index: 7, kind: input, shape index: {}]
  %s8 = inlined_call_operand.vmem [shape: f32[1,128], index: 8, kind: input, shape index: {}]
  %s9 = inlined_call_operand.hbm [shape: f32[16,128], index: 9, kind: output, shape index: {}]
  %s10 = sld [smem:[#allocation0]]
  $region54: #{tpu_custom_call.1} parent=0
    _
  %s12 = ssub.s32 1, %s10
  %s13 = scalar_select 0, %s12, %s10
  %14 = sst [smem:[#allocation2]] %s3
  $region1: #{tpu_custom_call.1} parent=0
    #allocation3 [shape = 'u8[65536]{0}', space=vmem, size = 0x10000, scoped, tag = 'input window, operand 5, single buffered']
    #allocation4 [shape = 's32[1]{0}', space=sflag, size = 0x4, scoped, tag = 'scoped memory for tpu_custom_call.1']
    #allocation5 [shape = 's32[1]{0}', space=sflag, size = 0x4, scoped, tag = 'scoped memory for tpu_custom_call.1']
    #allocation6 [shape = 'u8[65536]{0}', space=vmem, size = 0x10000, scoped, tag = 'input window, operand 7, single buffered']
    #allocation7 [shape = 's32[1]{0}', space=sflag, size = 0x4, scoped, tag = 'scoped memory for tpu_custom_call.1']
    #allocation8 [shape = 'u8[8192]{0}', space=vmem, size = 0x2000, scoped, tag = 'output window, operand 0, single buffered']
    %15 = vsyncpa [#allocation4], 0
    %16 = vsyncpa [#allocation7], 0
    %17 = vsyncpa [#allocation5], 0
    // Predicated region
    $region2: #{tpu_custom_call.1} parent=1 // pred_check
      _
    $region3: #{tpu_custom_call.1} parent=1 // pred_check_branch
      %19 = sbr.rel (0) target = $region5
    $region4: #{tpu_custom_call.1} parent=1 // pred_region
      _
    $region5: #{tpu_custom_call.1} parent=1 // pred_fallthru
      _
    // Predicated region
    $region6: #{tpu_custom_call.1} parent=1 // pred_check
      _
    $region7: #{tpu_custom_call.1} parent=1 // pred_check_branch
      %21 = sbr.rel (0) target = $region9
    $region8: #{tpu_custom_call.1} parent=1 // pred_region
      _
    $region9: #{tpu_custom_call.1} parent=1 // pred_fallthru
      _
    // Predicated region
    $region10: #{tpu_custom_call.1} parent=1 // pred_check
      _
    $region11: #{tpu_custom_call.1} parent=1 // pred_check_branch
      %23 = sbr.rel (0) target = $region13
    $region12: #{tpu_custom_call.1} parent=1 // pred_region
      _
    $region13: #{tpu_custom_call.1} parent=1 // pred_fallthru
      _
    // Predicated region
    $region14: #{tpu_custom_call.1} parent=1 // pred_check
      _
    $region15: #{tpu_custom_call.1} parent=1 // pred_check_branch
      %25 = sbr.rel (0) target = $region17
    $region16: #{tpu_custom_call.1} parent=1 // pred_region
      _
    $region17: #{tpu_custom_call.1} parent=1 // pred_fallthru
      _
    // Predicated region
    $region18: #{tpu_custom_call.1} parent=1 // pred_check
      _
    $region19: #{tpu_custom_call.1} parent=1 // pred_check_branch
      %27 = sbr.rel (0) target = $region21
    $region20: #{tpu_custom_call.1} parent=1 // pred_region
      _
    $region21: #{tpu_custom_call.1} parent=1 // pred_fallthru
      _
    // Predicated region
    $region22: #{tpu_custom_call.1} parent=1 // pred_check
      _
    $region23: #{tpu_custom_call.1} parent=1 // pred_check_branch
      %29 = sbr.rel (0) target = $region25
    $region24: #{tpu_custom_call.1} parent=1 // pred_region
      %s31 = ssub.s32 2048, 2048
      %32 = vsyncadd [#allocation4], %s31
      %s33 = sshll.u32 [#allocation3], 4
      %s34 = int_to_ptr.vmem [resolvable:$true] %s33
      %39 = dma.hbm_to_vmem [thread:$0]  %s5, 2048, %s34, [#allocation4], 128, 128, 8
    $region25: #{tpu_custom_call.1} parent=1 // pred_fallthru
      _
    // Predicated region
    $region26: #{tpu_custom_call.1} parent=1 // pred_check
      _
    $region27: #{tpu_custom_call.1} parent=1 // pred_check_branch
      %41 = sbr.rel (0) target = $region29
    $region28: #{tpu_custom_call.1} parent=1 // pred_region
      _
    $region29: #{tpu_custom_call.1} parent=1 // pred_fallthru
      _
    // Predicated region
    $region30: #{tpu_custom_call.1} parent=1 // pred_check
      _
    $region31: #{tpu_custom_call.1} parent=1 // pred_check_branch
      %43 = sbr.rel (0) target = $region33
    $region32: #{tpu_custom_call.1} parent=1 // pred_region
      %s45 = ssub.s32 2048, 2048
      %46 = vsyncadd [#allocation7], %s45
      %s47 = sshll.u32 [#allocation6], 4
      %s48 = int_to_ptr.vmem [resolvable:$true] %s47
      %53 = dma.hbm_to_vmem [thread:$0]  %s7, 2048, %s48, [#allocation7], 128, 128, 8
    $region33: #{tpu_custom_call.1} parent=1 // pred_fallthru
      _
    // Predicated region
    $region34: #{tpu_custom_call.1} parent=1 // pred_check
      _
    $region35: #{tpu_custom_call.1} parent=1 // pred_check_branch
      %55 = sbr.rel (0) target = $region37
    $region36: #{tpu_custom_call.1} parent=1 // pred_region
      _
    $region37: #{tpu_custom_call.1} parent=1 // pred_fallthru
      _
    // Predicated region
    $region38: #{tpu_custom_call.1} parent=1 // pred_check
      _
    $region39: #{tpu_custom_call.1} parent=1 // pred_check_branch
      %57 = sbr.rel (0) target = $region41
    $region40: #{tpu_custom_call.1} parent=1 // pred_region
      %58 = dma.done [#allocation4], 2048
    $region41: #{tpu_custom_call.1} parent=1 // pred_fallthru
      _
    // Predicated region
    $region42: #{tpu_custom_call.1} parent=1 // pred_check
      _
    $region43: #{tpu_custom_call.1} parent=1 // pred_check_branch
      %60 = sbr.rel (0) target = $region45
    $region44: #{tpu_custom_call.1} parent=1 // pred_region
      %61 = dma.done [#allocation7], 2048
    $region45: #{tpu_custom_call.1} parent=1 // pred_fallthru
      _
    %v62 = vld [vmem:[%s2] sm:$0x3f]
    %s63 = sld [smem:[#allocation2]]
    %v64 = vlaneseq
    %v65 = vshrl.u32 %v64, 7
    %v66 = vld [vmem:[%s0] sm:$0x1]
    %v67 = vlaneseq
    %v68 = vshrl.u32 %v67, 7
    %v69 = vsub.s32 0, %v68
    %v70 = vrot.slane %v66, %v69
    %vm71 = vcmp.eq.s32.totalorder %v70, %v65
    %v72 = vsel %vm71, 1, 0
    %v73 = vcvt.s32.f32 %v72
    %v74 = vld [vmem:[%s1] sm:$0x1]
    %v75 = vlaneseq
    %v76 = vshrl.u32 %v75, 7
    %v77 = vsub.s32 0, %v76
    %v78 = vrot.slane %v74, %v77
    %v79 = vmul.f32 %v73, %v78
    %81 = vset.pattern.permute.xlu0 0
    %82 = vperm.xlu0 %81, %v62
    %v83 = vpop.permute.xlu0 %82
    %v85 = vmul.f32 %v79, %v83
    %vm86 = vcmask 128000
    %v87 = vsel %vm86, %v85, 0.0
    %v88 = vrot.slane %v87, 4
    %v89 = vadd.f32 %v87, %v88
    %v90 = vrot.slane %v89, 2
    %v91 = vadd.f32 %v89, %v90
    %v92 = vrot.slane %v91, 1
    %v93 = vadd.f32 %v91, %v92
    %v94 = vstv %s63
    %v95 = vadd.f32 %v93, %v94
    %v96 = vtanh.pop %v95
    %v97 = vmul.f32 %v79, %v96
    %v98 = vadd.f32 %v97, 0.0
    %v99 = vld [vmem:[%s0 + $0x1] sm:$0x1]
    %v100 = vlaneseq
    %v101 = vshrl.u32 %v100, 7
    %v102 = vsub.s32 0, %v101
    %v103 = vrot.slane %v99, %v102
    %vm104 = vcmp.eq.s32.totalorder %v103, %v65
    %v105 = vsel %vm104, 1, 0
    %v106 = vcvt.s32.f32 %v105
    %v107 = vld [vmem:[%s1 + $0x1] sm:$0x1]
    %v108 = vlaneseq
    %v109 = vshrl.u32 %v108, 7
    %v110 = vsub.s32 0, %v109
    %v111 = vrot.slane %v107, %v110
    %v112 = vmul.f32 %v106, %v111
    %v113 = vmul.f32 %v112, %v83
    %v114 = vsel %vm86, %v113, 0.0
    %v115 = vrot.slane %v114, 4
    %v116 = vadd.f32 %v114, %v115
    %v117 = vrot.slane %v116, 2
    %v118 = vadd.f32 %v116, %v117
    %v119 = vrot.slane %v118, 1
    %v120 = vadd.f32 %v118, %v119
    %v121 = vadd.f32 %v120, %v94
    %v122 = vtanh.pop %v121
    %v123 = vmul.f32 %v112, %v122
    %v124 = vadd.f32 %v98, %v123
    %v125 = vld [vmem:[%s0 + $0x2] sm:$0x1]
    %v126 = vlaneseq
    %v127 = vshrl.u32 %v126, 7
    %v128 = vsub.s32 0, %v127
    %v129 = vrot.slane %v125, %v128
    %vm130 = vcmp.eq.s32.totalorder %v129, %v65
    %v131 = vsel %vm130, 1, 0
    %v132 = vcvt.s32.f32 %v131
    %v133 = vmul.f32 %v132, %v83
    %v134 = vsel %vm86, %v133, 0.0
    %v135 = vrot.slane %v134, 4
    %v136 = vadd.f32 %v134, %v135
    %v137 = vrot.slane %v136, 2
    %v138 = vadd.f32 %v136, %v137
    %v139 = vrot.slane %v138, 1
    %v140 = vadd.f32 %v138, %v139
    %v141 = vadd.f32 %v140, %v94
    %v142 = vtanh.pop %v141
    %v143 = vmul.f32 %v132, %v142
    %v144 = vadd.f32 %v124, %v143
    %v145 = vld [vmem:[%s0 + $0x3] sm:$0x1]
    %v146 = vlaneseq
    %v147 = vshrl.u32 %v146, 7
    %v148 = vsub.s32 0, %v147
    %v149 = vrot.slane %v145, %v148
    %vm150 = vcmp.eq.s32.totalorder %v149, %v65
    %v151 = vsel %vm150, 1, 0
    %v152 = vcvt.s32.f32 %v151
    %v153 = vmul.f32 %v152, %v83
    %v154 = vsel %vm86, %v153, 0.0
    %v155 = vrot.slane %v154, 4
    %v156 = vadd.f32 %v154, %v155
    %v157 = vrot.slane %v156, 2
    %v158 = vadd.f32 %v156, %v157
    %v159 = vrot.slane %v158, 1
    %v160 = vadd.f32 %v158, %v159
    %v161 = vadd.f32 %v160, %v94
    %v162 = vtanh.pop %v161
    %v163 = vmul.f32 %v152, %v162
    %v164 = vadd.f32 %v144, %v163
    %v165 = vld [vmem:[%s4] sm:$0x3f]
    %166 = vxpose.xlu0.b32.start [1/16] %v164, 128
    %167 = vxpose.xlu0.b32.cont [2/16] 0.0, 128
    %168 = vxpose.xlu0.b32.cont [3/16] 0.0, 128
    %169 = vxpose.xlu0.b32.cont [4/16] 0.0, 128
    %170 = vxpose.xlu0.b32.cont [5/16] 0.0, 128
    %171 = vxpose.xlu0.b32.cont [6/16] 0.0, 128
    %172 = vxpose.xlu0.b32.cont [7/16] 0.0, 128
    %173 = vxpose.xlu0.b32.cont [8/16] 0.0, 128
    %174 = vxpose.xlu0.b32.cont [9/16] 0.0, 128
    %175 = vxpose.xlu0.b32.cont [10/16] 0.0, 128
    %176 = vxpose.xlu0.b32.cont [11/16] 0.0, 128
    %177 = vxpose.xlu0.b32.cont [12/16] 0.0, 128
    %178 = vxpose.xlu0.b32.cont [13/16] 0.0, 128
    %179 = vxpose.xlu0.b32.cont [14/16] 0.0, 128
    %180 = vxpose.xlu0.b32.cont [15/16] 0.0, 128
    %181 = vxpose.xlu0.b32.end [16/16] 0.0, 128
    %v182 = vpop.trf.xlu0
    %v183 = vpop.trf.xlu0
    %v184 = vpop.trf.xlu0
    %v185 = vpop.trf.xlu0
    %v186 = vpop.trf.xlu0
    %v187 = vpop.trf.xlu0
    %v188 = vpop.trf.xlu0
    %v189 = vpop.trf.xlu0
    %v190 = vpop.trf.xlu0
    %v191 = vpop.trf.xlu0
    %v192 = vpop.trf.xlu0
    %v193 = vpop.trf.xlu0
    %v194 = vpop.trf.xlu0
    %v195 = vpop.trf.xlu0
    %v196 = vpop.trf.xlu0
    %v197 = vpop.trf.xlu0
    %vm198 = vcmask 48128
    %v200 = vsel %vm198, %v182, 0
    %v203 = vsel %vm198, %v183, 0
    %vm205 = vcmask 1045504
    %v207 = vsel %vm205, %v165, 0
    %209 = vmatprep.subr.mxu0 0.0
    %210 = vmatpush1.msra.mxu0 0.0
    %211 = vmatprep.subr.mxu0 0.0
    %212 = vmatpush1.msra.mxu0 0.0
    %213 = vmatprep.subr.mxu0 0.0
    %214 = vmatpush1.msra.mxu0 0.0
    %215 = vmatprep.subr.mxu0 0.0
    %216 = vmatpush1.msra.mxu0 0.0
    %217 = vmatprep.subr.mxu0 0.0
    %218 = vmatpush1.msra.mxu0 0.0
    %219 = vmatprep.subr.mxu0 0.0
    %220 = vmatpush1.msra.mxu0 0.0
    %221 = vmatprep.subr.mxu0 0.0
    %222 = vmatpush1.msra.mxu0 0.0
    %223 = vmatprep.subr.mxu0 0.0
    %224 = vmatpush1.msra.mxu0 0.0
    %225 = vmatprep.subr.mxu0 0.0
    %226 = vmatpush1.msra.mxu0 0.0
    %227 = vmatprep.subr.mxu0 0.0
    %228 = vmatpush1.msra.mxu0 0.0
    %229 = vmatprep.subr.mxu0 0.0
    %230 = vmatpush1.msra.mxu0 0.0
    %231 = vmatprep.subr.mxu0 0.0
    %232 = vmatpush1.msra.mxu0 0.0
    %233 = vmatprep.subr.mxu0 0.0
    %234 = vmatpush1.msra.mxu0 0.0
    %235 = vmatprep.subr.mxu0 0.0
    %236 = vmatpush1.msra.mxu0 0.0
    %237 = vmatprep.subr.mxu0 0.0
    %238 = vmatpush1.msra.mxu0 0.0
    %239 = vmatprep.subr.mxu0 0.0
    %240 = vmatpush1.msra.mxu0 %v207
    %241 = vmatprep.subr.mxu0 0.0
    %242 = vmatpush2.msra.mxu0 0.0
    %243 = vmatprep.subr.mxu0 0.0
    %244 = vmatpush2.msra.mxu0 0.0
    %245 = vmatprep.subr.mxu0 0.0
    %246 = vmatpush2.msra.mxu0 0.0
    %247 = vmatprep.subr.mxu0 0.0
    %248 = vmatpush2.msra.mxu0 0.0
    %249 = vmatprep.subr.mxu0 0.0
    %250 = vmatpush2.msra.mxu0 0.0
    %251 = vmatprep.subr.mxu0 0.0
    %252 = vmatpush2.msra.mxu0 0.0
    %253 = vmatprep.subr.mxu0 0.0
    %254 = vmatpush2.msra.mxu0 0.0
    %255 = vmatprep.subr.mxu0 0.0
    %256 = vmatpush2.msra.mxu0 0.0
    %257 = vmatprep.subr.mxu0 0.0
    %258 = vmatpush2.msra.mxu0 0.0
    %259 = vmatprep.subr.mxu0 0.0
    %260 = vmatpush2.msra.mxu0 0.0
    %261 = vmatprep.subr.mxu0 0.0
    %262 = vmatpush2.msra.mxu0 0.0
    %263 = vmatprep.subr.mxu0 0.0
    %264 = vmatpush2.msra.mxu0 0.0
    %265 = vmatprep.subr.mxu0 0.0
    %266 = vmatpush2.msra.mxu0 0.0
    %267 = vmatprep.subr.mxu0 0.0
    %268 = vmatpush2.msra.mxu0 0.0
    %269 = vmatprep.subr.mxu0 0.0
    %270 = vmatpush2.msra.mxu0 0.0
    %271 = vmatprep.subr.mxu0 0.0
    %272 = vmatpush2.msra.mxu0 0.0
    %273 = vmatprep.mubr.f32.mxu0 0.0
    %274 = vmatmul.mubr.f32.gmra.mxu0 %v200
    %v275 = vpop.f32.mrf.mxu0
    %v276 = vadd.f32 0.0, %v275
    %v277 = vpop.f32.mrf.mxu0
    %278 = vmatprep.mubr.f32.mxu0 0.0
    %279 = vmatmul.mubr.f32.gmra.mxu0 %v203
    %v280 = vpop.f32.mrf.mxu0
    %v281 = vadd.f32 0.0, %v280
    %v282 = vpop.f32.mrf.mxu0
    %283 = vdwg.mxu0
    %v284 = vld [vmem:[#allocation3] sm:$0xff]
    %v285 = vld [vmem:[#allocation3 + $0x8] sm:$0xff]
    %v286 = vld [vmem:[#allocation3 + $0x10] sm:$0xff]
    %v287 = vld [vmem:[#allocation3 + $0x18] sm:$0xff]
    %v288 = vld [vmem:[#allocation3 + $0x20] sm:$0xff]
    %v289 = vld [vmem:[#allocation3 + $0x28] sm:$0xff]
    %v290 = vld [vmem:[#allocation3 + $0x30] sm:$0xff]
    %v291 = vld [vmem:[#allocation3 + $0x38] sm:$0xff]
    %v292 = vld [vmem:[#allocation3 + $0x40] sm:$0xff]
    %v293 = vld [vmem:[#allocation3 + $0x48] sm:$0xff]
    %v294 = vld [vmem:[#allocation3 + $0x50] sm:$0xff]
    %v295 = vld [vmem:[#allocation3 + $0x58] sm:$0xff]
    %v296 = vld [vmem:[#allocation3 + $0x60] sm:$0xff]
    %v297 = vld [vmem:[#allocation3 + $0x68] sm:$0xff]
    %v298 = vld [vmem:[#allocation3 + $0x70] sm:$0xff]
    %v299 = vld [vmem:[#allocation3 + $0x78] sm:$0xff]
    %v300 = vld [vmem:[%s6] sm:$0x1]
    %v302 = vlaneseq
    %v303 = vshrl.u32 %v302, 7
    %v304 = vsub.s32 0, %v303
    %v305 = vrot.slane %v300, %v304
    %307 = vmatprep.subr.mxu0 0.0
    %308 = vmatpush1.msra.mxu0 %v299
    %309 = vmatprep.subr.mxu0 0.0
    %310 = vmatpush1.msra.mxu0 %v298
    %311 = vmatprep.subr.mxu0 0.0
    %312 = vmatpush1.msra.mxu0 %v297
    %313 = vmatprep.subr.mxu0 0.0
    %314 = vmatpush1.msra.mxu0 %v296
    %315 = vmatprep.subr.mxu0 0.0
    %316 = vmatpush1.msra.mxu0 %v295
    %317 = vmatprep.subr.mxu0 0.0
    %318 = vmatpush1.msra.mxu0 %v294
    %319 = vmatprep.subr.mxu0 0.0
    %320 = vmatpush1.msra.mxu0 %v293
    %321 = vmatprep.subr.mxu0 0.0
    %322 = vmatpush1.msra.mxu0 %v292
    %323 = vmatprep.subr.mxu0 0.0
    %324 = vmatpush1.msra.mxu0 %v291
    %325 = vmatprep.subr.mxu0 0.0
    %326 = vmatpush1.msra.mxu0 %v290
    %327 = vmatprep.subr.mxu0 0.0
    %328 = vmatpush1.msra.mxu0 %v289
    %329 = vmatprep.subr.mxu0 0.0
    %330 = vmatpush1.msra.mxu0 %v288
    %331 = vmatprep.subr.mxu0 0.0
    %332 = vmatpush1.msra.mxu0 %v287
    %333 = vmatprep.subr.mxu0 0.0
    %334 = vmatpush1.msra.mxu0 %v286
    %335 = vmatprep.subr.mxu0 0.0
    %336 = vmatpush1.msra.mxu0 %v285
    %337 = vmatprep.subr.mxu0 0.0
    %338 = vmatpush1.msra.mxu0 %v284
    %339 = vmatprep.subr.mxu0 0.0
    %340 = vmatpush2.msra.mxu0 0.0
    %341 = vmatprep.subr.mxu0 0.0
    %342 = vmatpush2.msra.mxu0 0.0
    %343 = vmatprep.subr.mxu0 0.0
    %344 = vmatpush2.msra.mxu0 0.0
    %345 = vmatprep.subr.mxu0 0.0
    %346 = vmatpush2.msra.mxu0 0.0
    %347 = vmatprep.subr.mxu0 0.0
    %348 = vmatpush2.msra.mxu0 0.0
    %349 = vmatprep.subr.mxu0 0.0
    %350 = vmatpush2.msra.mxu0 0.0
    %351 = vmatprep.subr.mxu0 0.0
    %352 = vmatpush2.msra.mxu0 0.0
    %353 = vmatprep.subr.mxu0 0.0
    %354 = vmatpush2.msra.mxu0 0.0
    %355 = vmatprep.subr.mxu0 0.0
    %356 = vmatpush2.msra.mxu0 0.0
    %357 = vmatprep.subr.mxu0 0.0
    %358 = vmatpush2.msra.mxu0 0.0
    %359 = vmatprep.subr.mxu0 0.0
    %360 = vmatpush2.msra.mxu0 0.0
    %361 = vmatprep.subr.mxu0 0.0
    %362 = vmatpush2.msra.mxu0 0.0
    %363 = vmatprep.subr.mxu0 0.0
    %364 = vmatpush2.msra.mxu0 0.0
    %365 = vmatprep.subr.mxu0 0.0
    %366 = vmatpush2.msra.mxu0 0.0
    %367 = vmatprep.subr.mxu0 0.0
    %368 = vmatpush2.msra.mxu0 0.0
    %369 = vmatprep.subr.mxu0 0.0
    %370 = vmatpush2.msra.mxu0 0.0
    %371 = vmatprep.mubr.f32.mxu0 0.0
    %372 = vmatmul.mubr.f32.gmra.mxu0 %v276
    %v373 = vpop.f32.mrf.mxu0
    %v374 = vadd.f32 %v305, %v373
    %v375 = vpop.f32.mrf.mxu0
    %376 = vmatprep.mubr.f32.mxu0 0.0
    %377 = vmatmul.mubr.f32.gmra.mxu0 %v281
    %v378 = vpop.f32.mrf.mxu0
    %v379 = vadd.f32 %v305, %v378
    %v380 = vpop.f32.mrf.mxu0
    %381 = vdwg.mxu0
    %v382 = vmax.f32 %v374, 0.0
    %v383 = vmax.f32 %v379, 0.0
    %v384 = vld [vmem:[#allocation6] sm:$0xff]
    %v385 = vld [vmem:[#allocation6 + $0x8] sm:$0xff]
    %v386 = vld [vmem:[#allocation6 + $0x10] sm:$0xff]
    %v387 = vld [vmem:[#allocation6 + $0x18] sm:$0xff]
    %v388 = vld [vmem:[#allocation6 + $0x20] sm:$0xff]
    %v389 = vld [vmem:[#allocation6 + $0x28] sm:$0xff]
    %v390 = vld [vmem:[#allocation6 + $0x30] sm:$0xff]
    %v391 = vld [vmem:[#allocation6 + $0x38] sm:$0xff]
    %v392 = vld [vmem:[#allocation6 + $0x40] sm:$0xff]
    %v393 = vld [vmem:[#allocation6 + $0x48] sm:$0xff]
    %v394 = vld [vmem:[#allocation6 + $0x50] sm:$0xff]
    %v395 = vld [vmem:[#allocation6 + $0x58] sm:$0xff]
    %v396 = vld [vmem:[#allocation6 + $0x60] sm:$0xff]
    %v397 = vld [vmem:[#allocation6 + $0x68] sm:$0xff]
    %v398 = vld [vmem:[#allocation6 + $0x70] sm:$0xff]
    %v399 = vld [vmem:[#allocation6 + $0x78] sm:$0xff]
    %v400 = vld [vmem:[%s8] sm:$0x1]
    %v402 = vlaneseq
    %v403 = vshrl.u32 %v402, 7
    %v404 = vsub.s32 0, %v403
    %v405 = vrot.slane %v400, %v404
    %407 = vmatprep.subr.mxu0 0.0
    %408 = vmatpush1.msra.mxu0 %v399
    %409 = vmatprep.subr.mxu0 0.0
    %410 = vmatpush1.msra.mxu0 %v398
    %411 = vmatprep.subr.mxu0 0.0
    %412 = vmatpush1.msra.mxu0 %v397
    %413 = vmatprep.subr.mxu0 0.0
    %414 = vmatpush1.msra.mxu0 %v396
    %415 = vmatprep.subr.mxu0 0.0
    %416 = vmatpush1.msra.mxu0 %v395
    %417 = vmatprep.subr.mxu0 0.0
    %418 = vmatpush1.msra.mxu0 %v394
    %419 = vmatprep.subr.mxu0 0.0
    %420 = vmatpush1.msra.mxu0 %v393
    %421 = vmatprep.subr.mxu0 0.0
    %422 = vmatpush1.msra.mxu0 %v392
    %423 = vmatprep.subr.mxu0 0.0
    %424 = vmatpush1.msra.mxu0 %v391
    %425 = vmatprep.subr.mxu0 0.0
    %426 = vmatpush1.msra.mxu0 %v390
    %427 = vmatprep.subr.mxu0 0.0
    %428 = vmatpush1.msra.mxu0 %v389
    %429 = vmatprep.subr.mxu0 0.0
    %430 = vmatpush1.msra.mxu0 %v388
    %431 = vmatprep.subr.mxu0 0.0
    %432 = vmatpush1.msra.mxu0 %v387
    %433 = vmatprep.subr.mxu0 0.0
    %434 = vmatpush1.msra.mxu0 %v386
    %435 = vmatprep.subr.mxu0 0.0
    %436 = vmatpush1.msra.mxu0 %v385
    %437 = vmatprep.subr.mxu0 0.0
    %438 = vmatpush1.msra.mxu0 %v384
    %439 = vmatprep.subr.mxu0 0.0
    %440 = vmatpush2.msra.mxu0 0.0
    %441 = vmatprep.subr.mxu0 0.0
    %442 = vmatpush2.msra.mxu0 0.0
    %443 = vmatprep.subr.mxu0 0.0
    %444 = vmatpush2.msra.mxu0 0.0
    %445 = vmatprep.subr.mxu0 0.0
    %446 = vmatpush2.msra.mxu0 0.0
    %447 = vmatprep.subr.mxu0 0.0
    %448 = vmatpush2.msra.mxu0 0.0
    %449 = vmatprep.subr.mxu0 0.0
    %450 = vmatpush2.msra.mxu0 0.0
    %451 = vmatprep.subr.mxu0 0.0
    %452 = vmatpush2.msra.mxu0 0.0
    %453 = vmatprep.subr.mxu0 0.0
    %454 = vmatpush2.msra.mxu0 0.0
    %455 = vmatprep.subr.mxu0 0.0
    %456 = vmatpush2.msra.mxu0 0.0
    %457 = vmatprep.subr.mxu0 0.0
    %458 = vmatpush2.msra.mxu0 0.0
    %459 = vmatprep.subr.mxu0 0.0
    %460 = vmatpush2.msra.mxu0 0.0
    %461 = vmatprep.subr.mxu0 0.0
    %462 = vmatpush2.msra.mxu0 0.0
    %463 = vmatprep.subr.mxu0 0.0
    %464 = vmatpush2.msra.mxu0 0.0
    %465 = vmatprep.subr.mxu0 0.0
    %466 = vmatpush2.msra.mxu0 0.0
    %467 = vmatprep.subr.mxu0 0.0
    %468 = vmatpush2.msra.mxu0 0.0
    %469 = vmatprep.subr.mxu0 0.0
    %470 = vmatpush2.msra.mxu0 0.0
    %471 = vmatprep.mubr.f32.mxu0 0.0
    %472 = vmatmul.mubr.f32.gmra.mxu0 %v382
    %v473 = vpop.f32.mrf.mxu0
    %v474 = vadd.f32 %v405, %v473
    %v475 = vpop.f32.mrf.mxu0
    %476 = vmatprep.mubr.f32.mxu0 0.0
    %477 = vmatmul.mubr.f32.gmra.mxu0 %v383
    %v478 = vpop.f32.mrf.mxu0
    %v479 = vadd.f32 %v405, %v478
    %v480 = vpop.f32.mrf.mxu0
    %481 = vdwg.mxu0
    %482 = vst [vmem:[#allocation8] sm:$0xff] %v474
    %483 = vst [vmem:[#allocation8 + $0x8] sm:$0xff] %v479
    // Predicated region
    $region46: #{tpu_custom_call.1} parent=1 // pred_check
      _
    $region47: #{tpu_custom_call.1} parent=1 // pred_check_branch
      %485 = sbr.rel (0) target = $region49
    $region48: #{tpu_custom_call.1} parent=1 // pred_region
      %s487 = ssub.s32 256, 256
      %488 = vsyncadd [#allocation5], %s487
      %s489 = sshll.u32 [#allocation8], 4
      %s490 = int_to_ptr.vmem [resolvable:$true] %s489
      %495 = dma.vmem_to_hbm [thread:$0]  %s490, 256, %s9, [#allocation5], 128, 128, 8
    $region49: #{tpu_custom_call.1} parent=1 // pred_fallthru
      _
    // Predicated region
    $region50: #{tpu_custom_call.1} parent=1 // pred_check
      _
    $region51: #{tpu_custom_call.1} parent=1 // pred_check_branch
      %497 = sbr.rel (0) target = $region53
    $region52: #{tpu_custom_call.1} parent=1 // pred_region
      %498 = dma.done [#allocation5], 256
    $region53: #{tpu_custom_call.1} parent=1 // pred_fallthru
      _
    %499 = vsyncpa [#allocation4], 1
    %500 = vsyncpa [#allocation7], 1
    %501 = vsyncpa [#allocation5], 1

</llo_original>
